<compile_context>
chip_gen: v5e
topology: v5e:2x2
jax: 0.10.0
libtpu: 0.0.40
codegen_flags: <defaults>
</compile_context>

<pallas_src>
import math

import jax
import jax.numpy as jnp
from jax.experimental import pallas as pl
from jax.experimental.pallas import tpu as pltpu


# ----------------------------------------------------------------------------
# helpers
# ----------------------------------------------------------------------------
def _round_up(x, m):
    return ((x + m - 1) // m) * m


def _vmem_limit_bytes():
    """Scoped-VMEM limit: well above the 16/32 MiB defaults, under physical."""
    try:
        cap = pltpu.get_tpu_info().vmem_capacity_bytes
    except Exception:
        cap = 64 * 1024 * 1024          # conservative (fits v7x's 64 MiB / TC)
    return min(int(cap * 3 // 4), 112 * 1024 * 1024)


def _pick_k_chunk(d_in, d_ffn, d_out, w_itemsize, vmem_limit_bytes):
    """Largest 128-multiple divisor of d_ffn (<=2048) whose double-buffered
    W1/W2 chunks stay under ~half the scoped VMEM limit."""
    if d_ffn % 128 != 0:
        return d_ffn                     # unaligned toy shapes: weights resident
    budget = vmem_limit_bytes // 2       # leave room for x / out tiles + accumulator
    best = 128
    c = 128
    while c <= min(d_ffn, 2048):
        if d_ffn % c == 0 and 2 * (d_in + d_out) * c * w_itemsize <= budget:
            best = c
        c += 128
    return best


# ----------------------------------------------------------------------------
# Fused FFN kernel.  Grid = (row tile i [parallel], d_ffn chunk k [arbitrary]).
# ----------------------------------------------------------------------------
def _ffn_kernel(x_ref, w1_ref, b1_ref, w2_ref, b2_ref, o_ref, acc_ref):
    k = pl.program_id(1)

    @pl.when(k == 0)
    def _():
        acc_ref[...] = jnp.zeros_like(acc_ref)

    # First matmul on the current d_ffn chunk (MXU, f32 accumulation).
    h = jnp.dot(x_ref[...].astype(w1_ref.dtype), w1_ref[...],
                preferred_element_type=jnp.float32)
    # Per-chunk bias + ReLU (separable across d_ffn chunks), VPU.
    h = jnp.maximum(h + b1_ref[...].astype(jnp.float32), 0.0)
    # Second matmul chunk accumulated into the f32 scratch (MXU).
    acc_ref[...] += jnp.dot(h.astype(w2_ref.dtype), w2_ref[...],
                            preferred_element_type=jnp.float32)

    @pl.when(k == pl.num_programs(1) - 1)
    def _():
        # b2 is added exactly once, at finalize.
        o_ref[...] = (acc_ref[...] + b2_ref[...].astype(jnp.float32)
                      ).astype(o_ref.dtype)


# ----------------------------------------------------------------------------
# Wrapper
# ----------------------------------------------------------------------------
def position_wise_ffn(x, w1, b1, w2, b2, *, tile_m=None, k_chunk=None,
                      vmem_limit_bytes=None):
    """x: (..., d_in) -> (..., d_out) = relu(x @ w1 + b1) @ w2 + b2."""
    orig_shape = x.shape
    d_in = orig_shape[-1]
    d_ffn = w1.shape[-1]
    d_out = w2.shape[-1]

    b1 = b1.reshape(1, d_ffn)
    b2 = b2.reshape(1, d_out)

    # Flatten all leading ("position") dims into one row axis (no data copy).
    x2 = x.reshape(-1, d_in)
    m = x2.shape[0]

    if vmem_limit_bytes is None:
        vmem_limit_bytes = _vmem_limit_bytes()
    w_itemsize = w1.dtype.itemsize

    # Row tile: large (big tiles amortize ~0.35us/step), multiple of 8 sublanes,
    # clamped to the (rounded-up) row count.  Smaller default on 64 MiB VMEM (v7x).
    if tile_m is None:
        tile_m = 512 if vmem_limit_bytes >= (64 << 20) else 256
    tile_m = _round_up(max(int(tile_m), 8), 8)
    tile_m = min(tile_m, _round_up(m, 8))

    # d_ffn reduction chunk.
    if k_chunk is None:
        k_chunk = _pick_k_chunk(d_in, d_ffn, d_out, w_itemsize, vmem_limit_bytes)
    if k_chunk != d_ffn and (d_ffn % k_chunk != 0 or k_chunk % 128 != 0):
        raise ValueError(
            f"k_chunk={k_chunk} must be a 128-multiple divisor of d_ffn={d_ffn}")

    grid = (pl.cdiv(m, tile_m), d_ffn // k_chunk)   # reduction axis last

    flops = 2 * m * d_in * d_ffn + 2 * m * d_ffn * d_out
    bytes_accessed = (x2.size * x2.dtype.itemsize
                      + w1.size * w1.dtype.itemsize + b1.size * b1.dtype.itemsize
                      + w2.size * w2.dtype.itemsize + b2.size * b2.dtype.itemsize
                      + m * d_out * x.dtype.itemsize)

    out = pl.pallas_call(
        _ffn_kernel,
        out_shape=jax.ShapeDtypeStruct((m, d_out), x.dtype),
        grid_spec=pltpu.PrefetchScalarGridSpec(
            num_scalar_prefetch=0,
            grid=grid,
            in_specs=[
                pl.BlockSpec((tile_m, d_in),   lambda i, k: (i, 0)),  # X row tile
                pl.BlockSpec((d_in, k_chunk),  lambda i, k: (0, k)),  # W1 col chunk
                pl.BlockSpec((1, k_chunk),     lambda i, k: (0, k)),  # b1 chunk
                pl.BlockSpec((k_chunk, d_out), lambda i, k: (k, 0)),  # W2 row chunk
                pl.BlockSpec((1, d_out),       lambda i, k: (0, 0)),  # b2 (resident)
            ],
            out_specs=pl.BlockSpec((tile_m, d_out), lambda i, k: (i, 0)),
            scratch_shapes=[pltpu.VMEM((tile_m, d_out), jnp.float32)],
        ),
        compiler_params=pltpu.CompilerParams(
            dimension_semantics=("parallel", "arbitrary"),
            vmem_limit_bytes=int(vmem_limit_bytes),
        ),
        cost_estimate=pl.CostEstimate(flops=int(flops), transcendentals=0,
                                      bytes_accessed=int(bytes_accessed)),
    )(x2, w1, b1, w2, b2)

    return out.reshape(*orig_shape[:-1], d_out)


# ----------------------------------------------------------------------------
# Module-like parameter container mirroring PyTorch PositionWiseFFN.
# Weights are stored as (in, out) (i.e. nn.Linear's W.T) so the kernel does a
# plain x @ W — same forward math as ffn_2(relu(ffn_1(X))).
# dtype=jnp.bfloat16 is recommended for real sizes (MXU bf16 peak, half the
# HBM/VMEM traffic); accumulation inside the kernel is always f32.
# ----------------------------------------------------------------------------
class PositionWiseFFN:
    def __init__(self, input_size, ffn_hidden_size, hidden_size_out, key,
                 dtype=jnp.float32):
        k1, k2, k3, k4 = jax.random.split(key, 4)
        s1 = 1.0 / math.sqrt(input_size)
        s2 = 1.0 / math.sqrt(ffn_hidden_size)
        u = jax.random.uniform
        self.w1 = u(k1, (input_size, ffn_hidden_size), jnp.float32, -s1, s1).astype(dtype)
        self.b1 = u(k2, (1, ffn_hidden_size),          jnp.float32, -s1, s1).astype(dtype)
        self.w2 = u(k3, (ffn_hidden_size, hidden_size_out), jnp.float32, -s2, s2).astype(dtype)
        self.b2 = u(k4, (1, hidden_size_out),          jnp.float32, -s2, s2).astype(dtype)

    def __call__(self, x, **kwargs):
        return position_wise_ffn(x, self.w1, self.b1, self.w2, self.b2, **kwargs)


# ----------------------------------------------------------------------------
if __name__ == "__main__":
    B, T = 2, 8
    D_IN, D_FFN, D_OUT = 128, 256, 128      # lane-aligned (128-multiple) feature dims

    key = jax.random.PRNGKey(0)
    pkey, xkey = jax.random.split(key)

    # ---- f32 check: small tiles force a real (2 row-tiles) x (2 k-chunks) grid,
    #      exercising the accumulator init/finalize path. ----
    ffn = PositionWiseFFN(D_IN, D_FFN, D_OUT, pkey, dtype=jnp.float32)
    x = jax.random.normal(xkey, (B, T, D_IN), jnp.float32)

    y = ffn(x, tile_m=8, k_chunk=128)
    jax.block_until_ready(y)

    ref = jnp.maximum(x @ ffn.w1 + ffn.b1, 0.0) @ ffn.w2 + ffn.b2
    assert y.shape == (B, T, D_OUT)
    assert jnp.allclose(y, ref, atol=2e-3, rtol=2e-3), \
        float(jnp.max(jnp.abs(y - ref)))

    # ---- bf16 check (recommended production dtype), auto tile selection. ----
    ffn16 = PositionWiseFFN(D_IN, D_FFN, D_OUT, pkey, dtype=jnp.bfloat16)
    x16 = x.astype(jnp.bfloat16)
    y16 = ffn16(x16)
    jax.block_until_ready(y16)

    ref16 = jnp.maximum(x16 @ ffn16.w1 + ffn16.b1, 0) @ ffn16.w2 + ffn16.b2
    assert y16.shape == (B, T, D_OUT)
    assert jnp.allclose(y16.astype(jnp.float32), ref16.astype(jnp.float32),
                        atol=5e-2, rtol=5e-2)

    print("KERNEL_OK")
</pallas_src>

<mosaic_0001>
module attributes {stable_mosaic.version = 11 : i64} {
  func.func @_ffn_kernel(%arg0: i32, %arg1: i32, %arg2: memref<8x128xf32, #tpu.memory_space<vmem>>, %arg3: memref<128x128xf32, #tpu.memory_space<vmem>>, %arg4: memref<1x128xf32, #tpu.memory_space<vmem>>, %arg5: memref<128x128xf32, #tpu.memory_space<vmem>>, %arg6: memref<1x128xf32, #tpu.memory_space<vmem>>, %arg7: memref<8x128xf32, #tpu.memory_space<vmem>>, %arg8: memref<8x128xf32, #tpu.memory_space<vmem>>) attributes {dimension_semantics = [#tpu.dimension_semantics<parallel>, #tpu.dimension_semantics<arbitrary>], iteration_bounds = array<i64: 2, 2>, scalar_prefetch = 0 : i64, scratch_operands = 1 : i64, tpu.core_type = #tpu.core_type<tc>, window_params = [{transform_indices = @transform_0, window_bounds = array<i64: 8, 128>}, {transform_indices = @transform_1, window_bounds = array<i64: 128, 128>}, {transform_indices = @transform_2, window_bounds = array<i64: 1, 128>}, {transform_indices = @transform_3, window_bounds = array<i64: 128, 128>}, {pipeline_mode = #tpu.pipeline_mode<synchronous>, transform_indices = @transform_4, window_bounds = array<i64: 1, 128>}, {transform_indices = @transform_5, window_bounds = array<i64: 8, 128>}]} {
    %c0_i32 = arith.constant 0 : i32
    %0 = arith.cmpi eq, %arg1, %c0_i32 : i32
    %1 = arith.extui %0 : i1 to i32
    %c0_i32_0 = arith.constant 0 : i32
    %2 = arith.cmpi ne, %1, %c0_i32_0 : i32
    scf.if %2 {
      %cst_15 = arith.constant 0.000000e+00 : f32
      %19 = vector.broadcast %cst_15 : f32 to vector<8x128xf32>
      %c0_16 = arith.constant 0 : index
      %c0_17 = arith.constant 0 : index
      %20 = vector.load %arg8[%c0_16, %c0_17] : memref<8x128xf32, #tpu.memory_space<vmem>>, vector<8x128xf32>
      tpu.vector_store %arg8[%c0_16, %c0_17], %19 {strides = array<i32>} : memref<8x128xf32, #tpu.memory_space<vmem>>, vector<8x128xf32>,
    } else {
    }
    %c0 = arith.constant 0 : index
    %c0_1 = arith.constant 0 : index
    %3 = vector.load %arg2[%c0, %c0_1] : memref<8x128xf32, #tpu.memory_space<vmem>>, vector<8x128xf32>
    %c0_2 = arith.constant 0 : index
    %c0_3 = arith.constant 0 : index
    %4 = vector.load %arg3[%c0_2, %c0_3] : memref<128x128xf32, #tpu.memory_space<vmem>>, vector<128x128xf32>
    %cst = arith.constant dense<0.000000e+00> : vector<8x128xf32>
    %5 = tpu.matmul %3, %4, %cst {dimension_numbers = #tpu.dot_dimension_numbers<[1], [0], [0], [1], [0, 0, 1, 1], [], []>} : vector<8x128xf32>, vector<128x128xf32>, vector<8x128xf32> -> vector<8x128xf32>
    %c0_4 = arith.constant 0 : index
    %c0_5 = arith.constant 0 : index
    %6 = vector.load %arg4[%c0_4, %c0_5] : memref<1x128xf32, #tpu.memory_space<vmem>>, vector<1x128xf32>
    %7 = vector.broadcast %6 : vector<1x128xf32> to vector<8x128xf32>
    %8 = arith.addf %5, %7 : vector<8x128xf32>
    %cst_6 = arith.constant 0.000000e+00 : f32
    %9 = vector.broadcast %cst_6 : f32 to vector<8x128xf32>
    %10 = arith.maximumf %8, %9 : vector<8x128xf32>
    %c0_7 = arith.constant 0 : index
    %c0_8 = arith.constant 0 : index
    %11 = vector.load %arg8[%c0_7, %c0_8] : memref<8x128xf32, #tpu.memory_space<vmem>>, vector<8x128xf32>
    %c0_9 = arith.constant 0 : index
    %c0_10 = arith.constant 0 : index
    %12 = vector.load %arg5[%c0_9, %c0_10] : memref<128x128xf32, #tpu.memory_space<vmem>>, vector<128x128xf32>
    %cst_11 = arith.constant dense<0.000000e+00> : vector<8x128xf32>
    %13 = tpu.matmul %10, %12, %cst_11 {dimension_numbers = #tpu.dot_dimension_numbers<[1], [0], [0], [1], [0, 0, 1, 1], [], []>} : vector<8x128xf32>, vector<128x128xf32>, vector<8x128xf32> -> vector<8x128xf32>
    %14 = arith.addf %11, %13 : vector<8x128xf32>
    %c0_12 = arith.constant 0 : index
    %c0_13 = arith.constant 0 : index
    %15 = vector.load %arg8[%c0_12, %c0_13] : memref<8x128xf32, #tpu.memory_space<vmem>>, vector<8x128xf32>
    tpu.vector_store %arg8[%c0_12, %c0_13], %14 {strides = array<i32>} : memref<8x128xf32, #tpu.memory_space<vmem>>, vector<8x128xf32>,
    %c1_i32 = arith.constant 1 : i32
    %16 = arith.cmpi eq, %arg1, %c1_i32 : i32
    %17 = arith.extui %16 : i1 to i32
    %c0_i32_14 = arith.constant 0 : i32
    %18 = arith.cmpi ne, %17, %c0_i32_14 : i32
    scf.if %18 {
      %c0_15 = arith.constant 0 : index
      %c0_16 = arith.constant 0 : index
      %19 = vector.load %arg8[%c0_15, %c0_16] : memref<8x128xf32, #tpu.memory_space<vmem>>, vector<8x128xf32>
      %c0_17 = arith.constant 0 : index
      %c0_18 = arith.constant 0 : index
      %20 = vector.load %arg6[%c0_17, %c0_18] : memref<1x128xf32, #tpu.memory_space<vmem>>, vector<1x128xf32>
      %21 = vector.broadcast %20 : vector<1x128xf32> to vector<8x128xf32>
      %22 = arith.addf %19, %21 : vector<8x128xf32>
      %c0_19 = arith.constant 0 : index
      %c0_20 = arith.constant 0 : index
      %23 = vector.load %arg7[%c0_19, %c0_20] : memref<8x128xf32, #tpu.memory_space<vmem>>, vector<8x128xf32>
      tpu.vector_store %arg7[%c0_19, %c0_20], %22 {strides = array<i32>} : memref<8x128xf32, #tpu.memory_space<vmem>>, vector<8x128xf32>,
    } else {
    }
    return
  }
  func.func @transform_0(%arg0: i32, %arg1: i32) -> (i32, i32) {
    %c0_i32 = arith.constant 0 : i32
    %c0_i32_0 = arith.constant 0 : i32
    return %arg0, %c0_i32 : i32, i32
  }
  func.func @transform_1(%arg0: i32, %arg1: i32) -> (i32, i32) {
    %c0_i32 = arith.constant 0 : i32
    %c0_i32_0 = arith.constant 0 : i32
    return %c0_i32, %arg1 : i32, i32
  }
  func.func @transform_2(%arg0: i32, %arg1: i32) -> (i32, i32) {
    %c0_i32 = arith.constant 0 : i32
    %c0_i32_0 = arith.constant 0 : i32
    return %c0_i32, %arg1 : i32, i32
  }
  func.func @transform_3(%arg0: i32, %arg1: i32) -> (i32, i32) {
    %c0_i32 = arith.constant 0 : i32
    %c0_i32_0 = arith.constant 0 : i32
    return %arg1, %c0_i32 : i32, i32
  }
  func.func @transform_4(%arg0: i32, %arg1: i32) -> (i32, i32) {
    %c0_i32 = arith.constant 0 : i32
    %c0_i32_0 = arith.constant 0 : i32
    %c0_i32_1 = arith.constant 0 : i32
    return %c0_i32, %c0_i32_0 : i32, i32
  }
  func.func @transform_5(%arg0: i32, %arg1: i32) -> (i32, i32) {
    %c0_i32 = arith.constant 0 : i32
    %c0_i32_0 = arith.constant 0 : i32
    return %arg0, %c0_i32 : i32, i32
  }
}

</mosaic_0001>

<llo_original>
// kernel: tpu_custom_call.1
$region0: #{tpu_custom_call.1}
  #allocation0 [shape = 'u32[]', space=smem, size = 0x4, offset = 0x4, fixed_abs, tag = 'smem constant byte address 0x4 - core index']
  #allocation1 [shape = 'u32[72,128]{1,0:T(1,128)}', space=vmem, size = 0x9000, scoped, tag = 'internal scratch']
  #allocation2 [shape = 'f32[8,128]{1,0:T(8,128)}', space=vmem, size = 0x1000, scoped, tag = 'scratch operand']
  %s0 = inlined_call_operand.hbm [shape: f32[16,128], index: 0, kind: input, shape index: {}]
  %s1 = inlined_call_operand.hbm [shape: f32[128,256], index: 1, kind: input, shape index: {}]
  %s2 = inlined_call_operand.hbm [shape: f32[1,256], index: 2, kind: input, shape index: {}]
  %s3 = inlined_call_operand.hbm [shape: f32[256,128], index: 3, kind: input, shape index: {}]
  %s4 = inlined_call_operand.vmem [shape: f32[1,128], index: 4, kind: input, shape index: {}]
  %s5 = inlined_call_operand.hbm [shape: f32[16,128], index: 5, kind: output, shape index: {}]
  %s6 = sld [smem:[#allocation0]]
  $region77: #{tpu_custom_call.1} parent=0
    _
  %s8 = ssub.s32 1, %s6
  %s9 = scalar_select 0, %s8, %s6
  $region1: #{tpu_custom_call.1} parent=0
    #allocation3 [shape = 'u8[8192]{0}', space=vmem, size = 0x2000, scoped, tag = 'input window, operand 0']
    #allocation4 [shape = 's32[2]{0}', space=sflag, size = 0x8, scoped, tag = 'scoped memory for tpu_custom_call.1']
    #allocation5 [shape = 's32[2]{0}', space=sflag, size = 0x8, scoped, tag = 'scoped memory for tpu_custom_call.1']
    #allocation6 [shape = 'u8[131072]{0}', space=vmem, size = 0x20000, scoped, tag = 'input window, operand 1']
    #allocation7 [shape = 's32[2]{0}', space=sflag, size = 0x8, scoped, tag = 'scoped memory for tpu_custom_call.1']
    #allocation8 [shape = 'u8[1024]{0}', space=vmem, size = 0x400, scoped, tag = 'input window, operand 2']
    #allocation9 [shape = 'u8[131072]{0}', space=vmem, size = 0x20000, scoped, tag = 'input window, operand 3']
    #allocation10 [shape = 's32[2]{0}', space=sflag, size = 0x8, scoped, tag = 'scoped memory for tpu_custom_call.1']
    #allocation11 [shape = 'u8[8192]{0}', space=vmem, size = 0x2000, scoped, tag = 'output window, operand 0']
    %10 = vsyncpa [#allocation4], 0
    %s11 = scalar_lea.sflag [#allocation4], 1
    %12 = vsyncpa %s11, 0
    %13 = vsyncpa [#allocation7], 0
    %s14 = scalar_lea.sflag [#allocation7], 1
    %15 = vsyncpa %s14, 0
    %16 = vsyncpa [#allocation10], 0
    %s17 = scalar_lea.sflag [#allocation10], 1
    %18 = vsyncpa %s17, 0
    %19 = vsyncpa [#allocation5], 0
    %s20 = scalar_lea.sflag [#allocation5], 1
    %21 = vsyncpa %s20, 0
    loop: start=0, step=1, limit=6
    $region2: #{tpu_custom_call.1} parent=1 // loop_pre_header
      _
    $region3: #{tpu_custom_call.1} parent=1 // loop_header
      %s23 = sphi 0, %s27
      %p24 = scmp.ge.s32.totalorder %s23, 6
      %s30 = sphi 0, %s42
      %s31 = sphi 0, %s38
      %s32 = sphi 0, %s30
      %s33 = sphi 0, %s31
      %s34 = sphi 0, %s32
      %s35 = sphi 0, %s33
      %s45 = sphi 0, %s47
      %s48 = sphi 0, %s45
      %s49 = sphi 0, %s48
      %s65 = sphi 0, %s49
      %s71 = sphi 0, %s73
      %s74 = sphi 0, %s71
      %s75 = sphi 0, %s74
      %s91 = sphi 0, %s75
      %s97 = sphi 0, %s99
      %s100 = sphi 0, %s97
      %s101 = sphi 0, %s100
      %s117 = sphi 0, %s101
      %s123 = sphi 0, %s125
      %s126 = sphi 0, %s123
      %s127 = sphi 0, %s126
      %s143 = sphi 0, %s127
      %s147 = sphi 0, %s147
      %s149 = sphi 0, %s147
      %s150 = sphi 0, %s149
      %s164 = sphi 0, %s150
      %s170 = sphi 0, %s172
      %s173 = sphi 0, %s170
      %s174 = sphi 0, %s173
      %s190 = sphi 0, %s174
    $region4: #{tpu_custom_call.1} parent=1 // loop_header_branch
      %26 = sbr.rel (%p24) target = $region8
    $region5: #{tpu_custom_call.1} parent=1 // loop_body
      %s28 = ssub.s32 %s23, 1
      %s29 = ssub.s32 %s23, 2
      %s36 = sadd.s32 1, %s31
      %p37 = scmp.ge.s32.totalorder %s36, 2
      %s38 = scalar_select %p37, 0, %s36
      %s39 = sadd.s32 1, %s30
      %s40 = scalar_select %p37, %s39, %s30
      %p41 = scmp.ge.s32.totalorder %s40, 2
      %s42 = scalar_select %p41, 0, %s40
      %s43 = ssub.s32 %s30, %s42
      %p44 = scmp.eq.s32.totalorder %s43, 0
      %s46 = sadd.s32 %s45, 1
      %s47 = scalar_select %p44, %s45, %s46
      %p50 = pneg %p44
      %p51 = scmp.eq.s32.totalorder %s23, 3
      %p52 = por %p50, %p51
      %p53 = scmp.ne.s32.totalorder %s45, %s48
      %p54 = scmp.eq.s32.totalorder %s23, 0
      %p55 = por %p53, %p54
      %p56 = scmp.ne.s32.totalorder %s45, %s48
      %p57 = scmp.eq.s32.totalorder %s28, 3
      %p58 = por %p56, %p57
      %p59 = scmp.ne.s32.totalorder %s48, %s49
      %p60 = scmp.eq.s32.totalorder %s28, 0
      %p61 = por %p59, %p60
      %p62 = scmp.ne.s32.totalorder %s48, %s49
      %p63 = scmp.eq.s32.totalorder %s29, 3
      %p64 = por %p62, %p63
      %p66 = scmp.ne.s32.totalorder %s49, %s65
      %p67 = scmp.eq.s32.totalorder %s29, 0
      %p68 = por %p66, %p67
      %s69 = ssub.s32 %s31, %s38
      %p70 = scmp.eq.s32.totalorder %s69, 0
      %s72 = sadd.s32 %s71, 1
      %s73 = scalar_select %p70, %s71, %s72
      %p76 = pneg %p70
      %p77 = scmp.eq.s32.totalorder %s23, 3
      %p78 = por %p76, %p77
      %p79 = scmp.ne.s32.totalorder %s71, %s74
      %p80 = scmp.eq.s32.totalorder %s23, 0
      %p81 = por %p79, %p80
      %p82 = scmp.ne.s32.totalorder %s71, %s74
      %p83 = scmp.eq.s32.totalorder %s28, 3
      %p84 = por %p82, %p83
      %p85 = scmp.ne.s32.totalorder %s74, %s75
      %p86 = scmp.eq.s32.totalorder %s28, 0
      %p87 = por %p85, %p86
      %p88 = scmp.ne.s32.totalorder %s74, %s75
      %p89 = scmp.eq.s32.totalorder %s29, 3
      %p90 = por %p88, %p89
      %p92 = scmp.ne.s32.totalorder %s75, %s91
      %p93 = scmp.eq.s32.totalorder %s29, 0
      %p94 = por %p92, %p93
      %s95 = ssub.s32 %s31, %s38
      %p96 = scmp.eq.s32.totalorder %s95, 0
      %s98 = sadd.s32 %s97, 1
      %s99 = scalar_select %p96, %s97, %s98
      %p102 = pneg %p96
      %p103 = scmp.eq.s32.totalorder %s23, 3
      %p104 = por %p102, %p103
      %p105 = scmp.ne.s32.totalorder %s97, %s100
      %p106 = scmp.eq.s32.totalorder %s23, 0
      %p107 = por %p105, %p106
      %p108 = scmp.ne.s32.totalorder %s97, %s100
      %p109 = scmp.eq.s32.totalorder %s28, 3
      %p110 = por %p108, %p109
      %p111 = scmp.ne.s32.totalorder %s100, %s101
      %p112 = scmp.eq.s32.totalorder %s28, 0
      %p113 = por %p111, %p112
      %p114 = scmp.ne.s32.totalorder %s100, %s101
      %p115 = scmp.eq.s32.totalorder %s29, 3
      %p116 = por %p114, %p115
      %p118 = scmp.ne.s32.totalorder %s101, %s117
      %p119 = scmp.eq.s32.totalorder %s29, 0
      %p120 = por %p118, %p119
      %s121 = ssub.s32 %s31, %s38
      %p122 = scmp.eq.s32.totalorder %s121, 0
      %s124 = sadd.s32 %s123, 1
      %s125 = scalar_select %p122, %s123, %s124
      %p128 = pneg %p122
      %p129 = scmp.eq.s32.totalorder %s23, 3
      %p130 = por %p128, %p129
      %p131 = scmp.ne.s32.totalorder %s123, %s126
      %p132 = scmp.eq.s32.totalorder %s23, 0
      %p133 = por %p131, %p132
      %p134 = scmp.ne.s32.totalorder %s123, %s126
      %p135 = scmp.eq.s32.totalorder %s28, 3
      %p136 = por %p134, %p135
      %p137 = scmp.ne.s32.totalorder %s126, %s127
      %p138 = scmp.eq.s32.totalorder %s28, 0
      %p139 = por %p137, %p138
      %p140 = scmp.ne.s32.totalorder %s126, %s127
      %p141 = scmp.eq.s32.totalorder %s29, 3
      %p142 = por %p140, %p141
      %p144 = scmp.ne.s32.totalorder %s127, %s143
      %p145 = scmp.eq.s32.totalorder %s29, 0
      %p146 = por %p144, %p145
      %s148 = sadd.s32 %s147, 1
      %p151 = scmp.eq.s32.totalorder %s23, 3
      %p152 = scmp.ne.s32.totalorder %s147, %s149
      %p153 = scmp.eq.s32.totalorder %s23, 0
      %p154 = por %p152, %p153
      %p155 = scmp.ne.s32.totalorder %s147, %s149
      %p156 = scmp.eq.s32.totalorder %s28, 3
      %p157 = por %p155, %p156
      %p158 = scmp.ne.s32.totalorder %s149, %s150
      %p159 = scmp.eq.s32.totalorder %s28, 0
      %p160 = por %p158, %p159
      %p161 = scmp.ne.s32.totalorder %s149, %s150
      %p162 = scmp.eq.s32.totalorder %s29, 3
      %p163 = por %p161, %p162
      %p165 = scmp.ne.s32.totalorder %s150, %s164
      %p166 = scmp.eq.s32.totalorder %s29, 0
      %p167 = por %p165, %p166
      %s168 = ssub.s32 %s30, %s42
      %p169 = scmp.eq.s32.totalorder %s168, 0
      %s171 = sadd.s32 %s170, 1
      %s172 = scalar_select %p169, %s170, %s171
      %p175 = pneg %p169
      %p176 = scmp.eq.s32.totalorder %s23, 3
      %p177 = por %p175, %p176
      %p178 = scmp.ne.s32.totalorder %s170, %s173
      %p179 = scmp.eq.s32.totalorder %s23, 0
      %p180 = por %p178, %p179
      %p181 = scmp.ne.s32.totalorder %s170, %s173
      %p182 = scmp.eq.s32.totalorder %s28, 3
      %p183 = por %p181, %p182
      %p184 = scmp.ne.s32.totalorder %s173, %s174
      %p185 = scmp.eq.s32.totalorder %s28, 0
      %p186 = por %p184, %p185
      %p187 = scmp.ne.s32.totalorder %s173, %s174
      %p188 = scmp.eq.s32.totalorder %s29, 3
      %p189 = por %p187, %p188
      %p191 = scmp.ne.s32.totalorder %s174, %s190
      %p192 = scmp.eq.s32.totalorder %s29, 0
      %p193 = por %p191, %p192
      %p194 = scmp.le.s32.totalorder 1, %s23
      %p195 = scmp.lt.s32.totalorder %s23, 5
      %p196 = pnand %p194, %p195
      %p197 = pneg %p196
      // Predicated region
      $region9: #{tpu_custom_call.1} parent=5 // pred_check
        _
      $region10: #{tpu_custom_call.1} parent=5 // pred_check_branch
        %199 = sbr.rel (%p196) target = $region12
      $region11: #{tpu_custom_call.1} parent=5 // pred_region
        %s200 = ssub.s32 %s23, 1
        // Predicated region
        $region13: #{tpu_custom_call.1} parent=11 // pred_check
          %p201 = pneg %p160
        $region14: #{tpu_custom_call.1} parent=11 // pred_check_branch
          %203 = sbr.rel (%p201) target = $region16
        $region15: #{tpu_custom_call.1} parent=11 // pred_region
          _
        $region16: #{tpu_custom_call.1} parent=11 // pred_fallthru
          _
      $region12: #{tpu_custom_call.1} parent=5 // pred_fallthru
        _
      %p204 = scmp.lt.s32.totalorder %s23, 4
      // Predicated region
      $region17: #{tpu_custom_call.1} parent=5 // pred_check
        %p205 = pneg %p204
      $region18: #{tpu_custom_call.1} parent=5 // pred_check_branch
        %207 = sbr.rel (%p205) target = $region20
      $region19: #{tpu_custom_call.1} parent=5 // pred_region
        // Predicated region
        $region21: #{tpu_custom_call.1} parent=19 // pred_check
          %p208 = pneg %p55
        $region22: #{tpu_custom_call.1} parent=19 // pred_check_branch
          %210 = sbr.rel (%p208) target = $region24
        $region23: #{tpu_custom_call.1} parent=19 // pred_region
          %s211 = sand.u32 %s45, 1
          %s212 = scalar_lea.sflag [#allocation4], %s211
          %s213 = sand.u32 %s45, 1
          %s214 = smul.addr %s213, 8
          %s215 = scalar_lea.vmem [#allocation3], %s214
          %217 = vsyncadd %s212, 0
          %s218 = smul.addr %s30, 8
          %s219 = scalar_lea.hbm %s0, %s218
          %s221 = sshll.u32 %s219, 4
          %s222 = int_to_ptr.hbm [resolvable:$true] %s221
          %s223 = sshll.u32 %s215, 4
          %s224 = int_to_ptr.vmem [resolvable:$true] %s223
          %226 = dma.hbm_to_vmem [thread:$0]  %s222, 128, %s224, %s212
        $region24: #{tpu_custom_call.1} parent=19 // pred_fallthru
          _
        // Predicated region
        $region25: #{tpu_custom_call.1} parent=19 // pred_check
          %p227 = pneg %p81
        $region26: #{tpu_custom_call.1} parent=19 // pred_check_branch
          %229 = sbr.rel (%p227) target = $region28
        $region27: #{tpu_custom_call.1} parent=19 // pred_region
          %s230 = sand.u32 %s23, 1
          %s231 = scalar_lea.sflag [#allocation7], %s230
          %s232 = sand.u32 %s71, 1
          %s233 = smul.addr %s232, 128
          %s234 = scalar_lea.vmem [#allocation6], %s233
          %236 = vsyncadd %s231, 0
          %s237 = smul.addr %s31, 8
          %s238 = scalar_lea.hbm %s1, %s237
          %s239 = sshll.u32 %s238, 4
          %s240 = int_to_ptr.hbm [resolvable:$true] %s239
          %s241 = sshll.u32 %s234, 4
          %s242 = int_to_ptr.vmem [resolvable:$true] %s241
          %247 = dma.hbm_to_vmem [thread:$0]  %s240, 2048, %s242, %s231, 256, 128, 8
        $region28: #{tpu_custom_call.1} parent=19 // pred_fallthru
          _
        // Predicated region
        $region29: #{tpu_custom_call.1} parent=19 // pred_check
          %p248 = pneg %p107
        $region30: #{tpu_custom_call.1} parent=19 // pred_check_branch
          %250 = sbr.rel (%p248) target = $region32
        $region31: #{tpu_custom_call.1} parent=19 // pred_region
          %s251 = sand.u32 %s23, 1
          %s252 = scalar_lea.sflag [#allocation7], %s251
          %s253 = sand.u32 %s97, 1
          %s254 = scalar_lea.vmem [#allocation8], %s253
          %256 = vsyncadd %s252, 0
          %s257 = scalar_lea.hbm %s2, %s31
          %s259 = sshll.u32 %s257, 4
          %s260 = int_to_ptr.hbm [resolvable:$true] %s259
          %s261 = sshll.u32 %s254, 4
          %s262 = int_to_ptr.vmem [resolvable:$true] %s261
          %264 = dma.hbm_to_vmem [thread:$0]  %s260, 16, %s262, %s252
        $region32: #{tpu_custom_call.1} parent=19 // pred_fallthru
          _
        // Predicated region
        $region33: #{tpu_custom_call.1} parent=19 // pred_check
          %p265 = pneg %p133
        $region34: #{tpu_custom_call.1} parent=19 // pred_check_branch
          %267 = sbr.rel (%p265) target = $region36
        $region35: #{tpu_custom_call.1} parent=19 // pred_region
          %s268 = sand.u32 %s123, 1
          %s269 = scalar_lea.sflag [#allocation10], %s268
          %s270 = sand.u32 %s123, 1
          %s271 = smul.addr %s270, 128
          %s272 = scalar_lea.vmem [#allocation9], %s271
          %s273 = smul.u32 16, %s31
          %275 = vsyncadd %s269, 0
          %s276 = smul.addr %s273, 8
          %s277 = scalar_lea.hbm %s3, %s276
          %s278 = sshll.u32 %s277, 4
          %s279 = int_to_ptr.hbm [resolvable:$true] %s278
          %s280 = sshll.u32 %s272, 4
          %s281 = int_to_ptr.vmem [resolvable:$true] %s280
          %286 = dma.hbm_to_vmem [thread:$0]  %s279, 2048, %s281, %s269, 128, 128, 8
        $region36: #{tpu_custom_call.1} parent=19 // pred_fallthru
          _
      $region20: #{tpu_custom_call.1} parent=5 // pred_fallthru
        _
      %p287 = scmp.le.s32.totalorder 1, %s23
      %p288 = scmp.lt.s32.totalorder %s23, 5
      %p289 = pnand %p287, %p288
      %p290 = pneg %p289
      // Predicated region
      $region37: #{tpu_custom_call.1} parent=5 // pred_check
        _
      $region38: #{tpu_custom_call.1} parent=5 // pred_check_branch
        %292 = sbr.rel (%p289) target = $region40
      $region39: #{tpu_custom_call.1} parent=5 // pred_region
        %s293 = ssub.s32 %s23, 1
        %s294 = sand.u32 %s48, 1
        %s295 = scalar_lea.sflag [#allocation4], %s294
        %s296 = sand.u32 %s48, 1
        %s297 = smul.addr %s296, 8
        %s298 = scalar_lea.vmem [#allocation3], %s297
        // Predicated region
        $region41: #{tpu_custom_call.1} parent=39 // pred_check
          %p299 = pneg %p61
        $region42: #{tpu_custom_call.1} parent=39 // pred_check_branch
          %301 = sbr.rel (%p299) target = $region44
        $region43: #{tpu_custom_call.1} parent=39 // pred_region
          %303 = dma.done %s295, 128
        $region44: #{tpu_custom_call.1} parent=39 // pred_fallthru
          _
        %s304 = sand.u32 %s28, 1
        %s305 = scalar_lea.sflag [#allocation7], %s304
        %s306 = sand.u32 %s74, 1
        %s307 = smul.addr %s306, 128
        %s308 = scalar_lea.vmem [#allocation6], %s307
        // Predicated region
        $region45: #{tpu_custom_call.1} parent=39 // pred_check
          %p309 = pneg %p87
        $region46: #{tpu_custom_call.1} parent=39 // pred_check_branch
          %311 = sbr.rel (%p309) target = $region48
        $region47: #{tpu_custom_call.1} parent=39 // pred_region
          %313 = dma.done %s305, 2048
        $region48: #{tpu_custom_call.1} parent=39 // pred_fallthru
          _
        %s314 = sand.u32 %s28, 1
        %s315 = scalar_lea.sflag [#allocation7], %s314
        %s316 = sand.u32 %s100, 1
        %s317 = scalar_lea.vmem [#allocation8], %s316
        // Predicated region
        $region49: #{tpu_custom_call.1} parent=39 // pred_check
          %p318 = pneg %p113
        $region50: #{tpu_custom_call.1} parent=39 // pred_check_branch
          %320 = sbr.rel (%p318) target = $region52
        $region51: #{tpu_custom_call.1} parent=39 // pred_region
          %322 = dma.done %s315, 16
        $region52: #{tpu_custom_call.1} parent=39 // pred_fallthru
          _
        %s323 = sand.u32 %s126, 1
        %s324 = scalar_lea.sflag [#allocation10], %s323
        %s325 = sand.u32 %s126, 1
        %s326 = smul.addr %s325, 128
        %s327 = scalar_lea.vmem [#allocation9], %s326
        // Predicated region
        $region53: #{tpu_custom_call.1} parent=39 // pred_check
          %p328 = pneg %p139
        $region54: #{tpu_custom_call.1} parent=39 // pred_check_branch
          %330 = sbr.rel (%p328) target = $region56
        $region55: #{tpu_custom_call.1} parent=39 // pred_region
          %332 = dma.done %s324, 2048
        $region56: #{tpu_custom_call.1} parent=39 // pred_fallthru
          _
        %s333 = sand.u32 %s48, 1
        %s334 = scalar_lea.sflag [#allocation4], %s333
        %s335 = sand.u32 %s48, 1
        %s336 = smul.addr %s335, 8
        %s337 = scalar_lea.vmem [#allocation3], %s336
        %p338 = pneg %p61
        %p339 = pneg %p58
        %s340 = sand.u32 %s28, 1
        %s341 = scalar_lea.sflag [#allocation7], %s340
        %s342 = sand.u32 %s74, 1
        %s343 = smul.addr %s342, 128
        %s344 = scalar_lea.vmem [#allocation6], %s343
        %p345 = pneg %p87
        %p346 = pneg %p84
        %s347 = sand.u32 %s28, 1
        %s348 = scalar_lea.sflag [#allocation7], %s347
        %s349 = sand.u32 %s100, 1
        %s350 = scalar_lea.vmem [#allocation8], %s349
        %p351 = pneg %p113
        %p352 = pneg %p110
        %s353 = sand.u32 %s126, 1
        %s354 = scalar_lea.sflag [#allocation10], %s353
        %s355 = sand.u32 %s126, 1
        %s356 = smul.addr %s355, 128
        %s357 = scalar_lea.vmem [#allocation9], %s356
        %p358 = pneg %p139
        %p359 = pneg %p136
        %p360 = pneg %p160
        %p361 = pneg %p157
        %p362 = pneg %p186
        %p363 = pneg %p183
        %s364 = sand.u32 %s173, 1
        %s365 = scalar_lea.sflag [#allocation5], %s364
        %s366 = sand.u32 %s173, 1
        %s367 = smul.addr %s366, 8
        %s368 = scalar_lea.vmem [#allocation11], %s367
        %s369 = smul.u32 16, %s33
        %p370 = scmp.eq.s32.totalorder %s33, 0
        // Predicated region
        $region57: #{tpu_custom_call.1} parent=39 // pred_check
          %p371 = pneg %p370
        $region58: #{tpu_custom_call.1} parent=39 // pred_check_branch
          %373 = sbr.rel (%p371) target = $region60
        $region59: #{tpu_custom_call.1} parent=39 // pred_region
          %374 = vst [vmem:[#allocation2] sm:$0xff] 0.0
        $region60: #{tpu_custom_call.1} parent=39 // pred_fallthru
          _
        %v375 = vld [vmem:[%s298] sm:$0xff]
        %v376 = vld [vmem:[%s308] sm:$0xff]
        %v377 = vld [vmem:[%s308 + $0x8] sm:$0xff]
        %v378 = vld [vmem:[%s308 + $0x10] sm:$0xff]
        %v379 = vld [vmem:[%s308 + $0x18] sm:$0xff]
        %v380 = vld [vmem:[%s308 + $0x20] sm:$0xff]
        %v381 = vld [vmem:[%s308 + $0x28] sm:$0xff]
        %v382 = vld [vmem:[%s308 + $0x30] sm:$0xff]
        %v383 = vld [vmem:[%s308 + $0x38] sm:$0xff]
        %v384 = vld [vmem:[%s308 + $0x40] sm:$0xff]
        %v385 = vld [vmem:[%s308 + $0x48] sm:$0xff]
        %v386 = vld [vmem:[%s308 + $0x50] sm:$0xff]
        %v387 = vld [vmem:[%s308 + $0x58] sm:$0xff]
        %v388 = vld [vmem:[%s308 + $0x60] sm:$0xff]
        %v389 = vld [vmem:[%s308 + $0x68] sm:$0xff]
        %v390 = vld [vmem:[%s308 + $0x70] sm:$0xff]
        %v391 = vld [vmem:[%s308 + $0x78] sm:$0xff]
        %v392 = vld [vmem:[%s317] sm:$0x1]
        %v394 = vperm.slane %v392, 0
        %396 = vmatpush.msra.mxu0 %v391
        %397 = vmatpush.msra.mxu0 %v390
        %398 = vmatpush.msra.mxu0 %v389
        %399 = vmatpush.msra.mxu0 %v388
        %400 = vmatpush.msra.mxu0 %v387
        %401 = vmatpush.msra.mxu0 %v386
        %402 = vmatpush.msra.mxu0 %v385
        %403 = vmatpush.msra.mxu0 %v384
        %404 = vmatpush.msra.mxu0 %v383
        %405 = vmatpush.msra.mxu0 %v382
        %406 = vmatpush.msra.mxu0 %v381
        %407 = vmatpush.msra.mxu0 %v380
        %408 = vmatpush.msra.mxu0 %v379
        %409 = vmatpush.msra.mxu0 %v378
        %410 = vmatpush.msra.mxu0 %v377
        %411 = vmatpush.msra.mxu0 %v376
        %412 = vmatmul.f32.gmra.mxu0 %v375
        %v413 = vpop.f32.mrf.mxu0
        %v414 = vadd.f32 %v394, %v413
        %415 = vdwg.mxu0
        %v416 = vmax.f32 %v414, 0.0
        %v417 = vld [vmem:[#allocation2] sm:$0xff]
        %v418 = vld [vmem:[%s327] sm:$0xff]
        %v419 = vld [vmem:[%s327 + $0x8] sm:$0xff]
        %v420 = vld [vmem:[%s327 + $0x10] sm:$0xff]
        %v421 = vld [vmem:[%s327 + $0x18] sm:$0xff]
        %v422 = vld [vmem:[%s327 + $0x20] sm:$0xff]
        %v423 = vld [vmem:[%s327 + $0x28] sm:$0xff]
        %v424 = vld [vmem:[%s327 + $0x30] sm:$0xff]
        %v425 = vld [vmem:[%s327 + $0x38] sm:$0xff]
        %v426 = vld [vmem:[%s327 + $0x40] sm:$0xff]
        %v427 = vld [vmem:[%s327 + $0x48] sm:$0xff]
        %v428 = vld [vmem:[%s327 + $0x50] sm:$0xff]
        %v429 = vld [vmem:[%s327 + $0x58] sm:$0xff]
        %v430 = vld [vmem:[%s327 + $0x60] sm:$0xff]
        %v431 = vld [vmem:[%s327 + $0x68] sm:$0xff]
        %v432 = vld [vmem:[%s327 + $0x70] sm:$0xff]
        %v433 = vld [vmem:[%s327 + $0x78] sm:$0xff]
        %434 = vmatpush.msra.mxu0 %v433
        %435 = vmatpush.msra.mxu0 %v432
        %436 = vmatpush.msra.mxu0 %v431
        %437 = vmatpush.msra.mxu0 %v430
        %438 = vmatpush.msra.mxu0 %v429
        %439 = vmatpush.msra.mxu0 %v428
        %440 = vmatpush.msra.mxu0 %v427
        %441 = vmatpush.msra.mxu0 %v426
        %442 = vmatpush.msra.mxu0 %v425
        %443 = vmatpush.msra.mxu0 %v424
        %444 = vmatpush.msra.mxu0 %v423
        %445 = vmatpush.msra.mxu0 %v422
        %446 = vmatpush.msra.mxu0 %v421
        %447 = vmatpush.msra.mxu0 %v420
        %448 = vmatpush.msra.mxu0 %v419
        %449 = vmatpush.msra.mxu0 %v418
        %450 = vmatmul.f32.gmra.mxu0 %v416
        %v451 = vpop.f32.mrf.mxu0
        %v452 = vadd.f32 0.0, %v451
        %453 = vdwg.mxu0
        %v454 = vadd.f32 %v417, %v452
        %455 = vst [vmem:[#allocation2] sm:$0xff] %v454
        %p456 = scmp.eq.s32.totalorder %s33, 1
        // Predicated region
        $region61: #{tpu_custom_call.1} parent=39 // pred_check
          %p457 = pneg %p456
        $region62: #{tpu_custom_call.1} parent=39 // pred_check_branch
          %459 = sbr.rel (%p457) target = $region64
        $region63: #{tpu_custom_call.1} parent=39 // pred_region
          %v460 = vld [vmem:[#allocation2] sm:$0xff]
          %v461 = vld [vmem:[%s4] sm:$0x1]
          %v463 = vperm.slane %v461, 0
          %v465 = vadd.f32 %v460, %v463
          %466 = vst [vmem:[%s368] sm:$0xff] %v465
        $region64: #{tpu_custom_call.1} parent=39 // pred_fallthru
          _
        %s467 = sand.u32 %s173, 1
        %s468 = scalar_lea.sflag [#allocation5], %s467
        %s469 = sand.u32 %s173, 1
        %s470 = smul.addr %s469, 8
        %s471 = scalar_lea.vmem [#allocation11], %s470
        // Predicated region
        $region65: #{tpu_custom_call.1} parent=39 // pred_check
          %p472 = pneg %p183
        $region66: #{tpu_custom_call.1} parent=39 // pred_check_branch
          %474 = sbr.rel (%p472) target = $region68
        $region67: #{tpu_custom_call.1} parent=39 // pred_region
          %476 = vsyncadd %s468, 0
          %s477 = smul.addr %s32, 8
          %s478 = scalar_lea.hbm %s5, %s477
          %s480 = sshll.u32 %s471, 4
          %s481 = int_to_ptr.vmem [resolvable:$true] %s480
          %s482 = sshll.u32 %s478, 4
          %s483 = int_to_ptr.hbm [resolvable:$true] %s482
          %485 = dma.vmem_to_hbm [thread:$0]  %s481, 128, %s483, %s468
        $region68: #{tpu_custom_call.1} parent=39 // pred_fallthru
          _
      $region40: #{tpu_custom_call.1} parent=5 // pred_fallthru
        _
      %p486 = scmp.le.s32.totalorder 2, %s23
      // Predicated region
      $region69: #{tpu_custom_call.1} parent=5 // pred_check
        %p487 = pneg %p486
      $region70: #{tpu_custom_call.1} parent=5 // pred_check_branch
        %489 = sbr.rel (%p487) target = $region72
      $region71: #{tpu_custom_call.1} parent=5 // pred_region
        %s490 = ssub.s32 %s23, 2
        // Predicated region
        $region73: #{tpu_custom_call.1} parent=71 // pred_check
          %p491 = pneg %p189
        $region74: #{tpu_custom_call.1} parent=71 // pred_check_branch
          %493 = sbr.rel (%p491) target = $region76
        $region75: #{tpu_custom_call.1} parent=71 // pred_region
          %s494 = sand.u32 %s174, 1
          %s495 = scalar_lea.sflag [#allocation5], %s494
          %s496 = sand.u32 %s174, 1
          %s497 = smul.addr %s496, 8
          %s498 = scalar_lea.vmem [#allocation11], %s497
          %500 = dma.done %s495, 128
        $region76: #{tpu_custom_call.1} parent=71 // pred_fallthru
          _
      $region72: #{tpu_custom_call.1} parent=5 // pred_fallthru
        _
    $region6: #{tpu_custom_call.1} parent=1 // loop_footer
      %s27 = sadd.s32 1, %s23
    $region7: #{tpu_custom_call.1} parent=1 // loop_footer_branch
      %22 = sbr.rel target = $region3
    $region8: #{tpu_custom_call.1} parent=1 // loop_exit
      _
    %501 = vsyncpa [#allocation4], 1
    %s502 = scalar_lea.sflag [#allocation4], 1
    %503 = vsyncpa %s502, 1
    %504 = vsyncpa [#allocation7], 1
    %s505 = scalar_lea.sflag [#allocation7], 1
    %506 = vsyncpa %s505, 1
    %507 = vsyncpa [#allocation10], 1
    %s508 = scalar_lea.sflag [#allocation10], 1
    %509 = vsyncpa %s508, 1
    %510 = vsyncpa [#allocation5], 1
    %s511 = scalar_lea.sflag [#allocation5], 1
    %512 = vsyncpa %s511, 1

</llo_original>
